<compile_context>
chip_gen: v5e
topology: v5e:2x2
jax: 0.10.0
libtpu: 0.0.40
codegen_flags: <defaults>
</compile_context>

<pallas_src>
import functools

import jax
import jax.numpy as jnp
from jax.experimental import pallas as pl
from jax.experimental.pallas import tpu as pltpu


def _round_up(n, m):
    return ((n + m - 1) // m) * m


def _residual_norm_kernel(x_ref, alpha_ref, bias_ref, o_ref, *, eps, features):
    """out = x + (alpha * (x - mean) / (std_unbiased + eps) + bias); rows independent."""
    x = x_ref[...].astype(jnp.float32)                     # (TILE_ROWS, H)

    # One-pass statistics: both lane reductions issue over a single read of x.
    # The block covers exactly the true H lanes, so no mask is needed.
    s = jnp.sum(x, axis=-1, keepdims=True)
    sq = jnp.sum(x * x, axis=-1, keepdims=True)
    mean = s * jnp.float32(1.0 / features)

    # PyTorch x.std() is the unbiased estimator (Bessel, ddof=1); eps is added to std.
    var = (sq - s * mean) * jnp.float32(1.0 / max(features - 1, 1))
    var = jnp.maximum(var, 0.0)                            # guard f32 cancellation
    denom = jnp.sqrt(var) + jnp.float32(eps)

    # Approximate reciprocal on the (otherwise idle) EUP slot, refined with one
    # Newton-Raphson step so accuracy stays at f32 level.
    inv = pl.reciprocal(denom, approx=True)
    inv = inv * (jnp.float32(2.0) - denom * inv)

    alpha = alpha_ref[...].astype(jnp.float32)
    bias = bias_ref[...].astype(jnp.float32)
    y = alpha * ((x - mean) * inv) + bias

    # ResidualConnection: x + dropout(sublayer(norm(x))) with identity sublayer and
    # inference-mode dropout.
    o_ref[...] = (x + y).astype(o_ref.dtype)


def _sublane_multiple(dtype):
    # Packed-sublane row multiple: 8 for 32-bit, 16 for bf16/fp16, 32 for int8/fp8.
    bits = jnp.dtype(dtype).itemsize * 8
    return max(8, 256 // bits)


def _choose_tile_rows(rows, h, dtype, *, vmem_limit_bytes, cap=1024):
    dtype_bytes = jnp.dtype(dtype).itemsize
    sub = _sublane_multiple(dtype)
    # Per tile-row VMEM bytes: 2x double-buffered input + 2x double-buffered output
    # blocks in the I/O dtype, plus ~3 live f32 temporaries inside the kernel
    # (x widened to f32, one product/diff tile, and y).
    per_row = (4 * dtype_bytes + 3 * 4) * h
    budget = int(vmem_limit_bytes * 0.75)       # headroom for alpha/bias and misc
    t = max(sub, budget // max(per_row, 1))
    t = min(t, cap)
    t = max(sub, (t // sub) * sub)              # packed-sublane multiple for the dtype
    t = min(t, _round_up(rows, sub))            # never tile larger than the problem
    return t


def residual_connection(x, alpha, bias, *, epsilon=1e-6):
    """ResidualConnection.forward with identity sublayer and inference-mode dropout.

    x: (batch, seq_len, hidden); alpha, bias: (hidden,).
    """
    b, s, h = x.shape
    rows = b * s
    dtype_bytes = jnp.dtype(x.dtype).itemsize

    vmem_limit = 32 * 1024 * 1024
    tile_rows = _choose_tile_rows(rows, h, x.dtype, vmem_limit_bytes=vmem_limit)
    if tile_rows < 256 and rows > tile_rows:
        # Very wide hidden dims: allow a bigger scoped-VMEM budget on 128 MiB VMEM
        # parts (v5e/v6e) so per-step overhead stays amortized; keep 32 MiB on v7x
        # (only 64 MiB physical VMEM per TensorCore).
        try:
            if getattr(pltpu.get_tpu_info(), "vmem_capacity_bytes", 0) >= (128 << 20):
                vmem_limit = 64 * 1024 * 1024
                tile_rows = _choose_tile_rows(
                    rows, h, x.dtype, vmem_limit_bytes=vmem_limit)
        except Exception:
            pass

    # Free reshapes only — no jnp.pad and no output slice, so no extra HBM passes.
    # The overhanging last row-block (when rows % tile_rows != 0) reads undefined rows,
    # which is safe: every row is independent and OOB writes are dropped.
    x2d = x.reshape(rows, h)
    alpha2d = alpha.reshape(1, h)
    bias2d = bias.reshape(1, h)

    kernel = functools.partial(_residual_norm_kernel, eps=epsilon, features=h)

    cost = pl.CostEstimate(
        flops=8 * rows * h,
        transcendentals=2 * rows,
        bytes_accessed=2 * rows * h * dtype_bytes,
    )

    out2d = pl.pallas_call(
        kernel,
        out_shape=jax.ShapeDtypeStruct((rows, h), x.dtype),
        grid=(pl.cdiv(rows, tile_rows),),
        in_specs=[
            pl.BlockSpec((tile_rows, h), lambda i: (i, 0)),
            pl.BlockSpec((1, h), lambda i: (0, 0)),
            pl.BlockSpec((1, h), lambda i: (0, 0)),
        ],
        out_specs=pl.BlockSpec((tile_rows, h), lambda i: (i, 0)),
        compiler_params=pltpu.CompilerParams(
            # TODO(synk): on v7x (2 TensorCores/chip) consider pltpu.CORE_PARALLEL here
            # so the row axis shards across both cores and reaches the chip roofline.
            dimension_semantics=("parallel",),
            vmem_limit_bytes=vmem_limit,
        ),
        cost_estimate=cost,
    )(x2d, alpha2d, bias2d)

    return out2d.reshape(b, s, h)


if __name__ == "__main__":
    batch, seq_len, hidden = 2, 8, 32

    key = jax.random.PRNGKey(0)
    x = jax.random.normal(key, (batch, seq_len, hidden), dtype=jnp.float32)

    # Deterministic parameter init matching LayerNormalization.__init__:
    #   alpha = ones(features), bias = zeros(features)
    alpha = jnp.ones((hidden,), dtype=jnp.float32)
    bias = jnp.zeros((hidden,), dtype=jnp.float32)

    # TODO(synk): `sublayer` is an injected callable with no implementation in the spec
    # and nn.Dropout is inference-mode here; both are treated as identity in the fused
    # kernel.
    out = residual_connection(x, alpha, bias, epsilon=1e-6)
    jax.block_until_ready(out)

    # Plain-JAX reference: x + (alpha * (x - mean) / (std_unbiased + eps) + bias).
    mean = jnp.mean(x, axis=-1, keepdims=True)
    std = jnp.std(x, axis=-1, keepdims=True, ddof=1)
    ref = x + (alpha * (x - mean) / (std + 1e-6) + bias)

    assert jnp.allclose(out, ref, atol=1e-4, rtol=1e-4), "mismatch vs reference"

    print("KERNEL_OK")
</pallas_src>

<mosaic_0001>
module attributes {stable_mosaic.version = 11 : i64} {
  func.func @_residual_norm_kernel(%arg0: i32, %arg1: memref<16x32xf32, #tpu.memory_space<vmem>>, %arg2: memref<1x32xf32, #tpu.memory_space<vmem>>, %arg3: memref<1x32xf32, #tpu.memory_space<vmem>>, %arg4: memref<16x32xf32, #tpu.memory_space<vmem>>) attributes {dimension_semantics = [#tpu.dimension_semantics<parallel>], iteration_bounds = array<i64: 1>, scalar_prefetch = 0 : i64, scratch_operands = 0 : i64, tpu.core_type = #tpu.core_type<tc>, window_params = [{transform_indices = @transform_0, window_bounds = array<i64: 16, 32>}, {pipeline_mode = #tpu.pipeline_mode<synchronous>, transform_indices = @transform_1, window_bounds = array<i64: 1, 32>}, {pipeline_mode = #tpu.pipeline_mode<synchronous>, transform_indices = @transform_2, window_bounds = array<i64: 1, 32>}, {transform_indices = @transform_3, window_bounds = array<i64: 16, 32>}]} {
    %c0 = arith.constant 0 : index
    %c0_0 = arith.constant 0 : index
    %0 = vector.load %arg1[%c0, %c0_0] : memref<16x32xf32, #tpu.memory_space<vmem>>, vector<16x32xf32>
    %cst = arith.constant dense<0.000000e+00> : vector<16xf32>
    %1 = vector.multi_reduction <add>, %0, %cst [1] : vector<16x32xf32> to vector<16xf32>
    %2 = vector.shape_cast %1 : vector<16xf32> to vector<16x1xf32>
    %3 = arith.mulf %0, %0 : vector<16x32xf32>
    %cst_1 = arith.constant dense<0.000000e+00> : vector<16xf32>
    %4 = vector.multi_reduction <add>, %3, %cst_1 [1] : vector<16x32xf32> to vector<16xf32>
    %5 = vector.shape_cast %4 : vector<16xf32> to vector<16x1xf32>
    %cst_2 = arith.constant 3.125000e-02 : f32
    %6 = vector.broadcast %cst_2 : f32 to vector<16x1xf32>
    %7 = arith.mulf %2, %6 : vector<16x1xf32>
    %8 = arith.mulf %2, %7 : vector<16x1xf32>
    %9 = arith.subf %5, %8 : vector<16x1xf32>
    %cst_3 = arith.constant 0.0322580636 : f32
    %10 = vector.broadcast %cst_3 : f32 to vector<16x1xf32>
    %11 = arith.mulf %9, %10 : vector<16x1xf32>
    %cst_4 = arith.constant 0.000000e+00 : f32
    %12 = vector.broadcast %cst_4 : f32 to vector<16x1xf32>
    %13 = arith.maximumf %11, %12 : vector<16x1xf32>
    %14 = math.sqrt %13 : vector<16x1xf32>
    %cst_5 = arith.constant 9.99999997E-7 : f32
    %15 = vector.broadcast %cst_5 : f32 to vector<16x1xf32>
    %16 = arith.addf %14, %15 : vector<16x1xf32>
    %17 = tpu.reciprocal %16 {approx = true} : vector<16x1xf32> -> vector<16x1xf32>
    %18 = arith.mulf %16, %17 : vector<16x1xf32>
    %cst_6 = arith.constant 2.000000e+00 : f32
    %19 = vector.broadcast %cst_6 : f32 to vector<16x1xf32>
    %20 = arith.subf %19, %18 : vector<16x1xf32>
    %21 = arith.mulf %17, %20 : vector<16x1xf32>
    %c0_7 = arith.constant 0 : index
    %c0_8 = arith.constant 0 : index
    %22 = vector.load %arg2[%c0_7, %c0_8] : memref<1x32xf32, #tpu.memory_space<vmem>>, vector<1x32xf32>
    %c0_9 = arith.constant 0 : index
    %c0_10 = arith.constant 0 : index
    %23 = vector.load %arg3[%c0_9, %c0_10] : memref<1x32xf32, #tpu.memory_space<vmem>>, vector<1x32xf32>
    %24 = vector.broadcast %7 : vector<16x1xf32> to vector<16x32xf32>
    %25 = arith.subf %0, %24 : vector<16x32xf32>
    %26 = vector.broadcast %21 : vector<16x1xf32> to vector<16x32xf32>
    %27 = arith.mulf %25, %26 : vector<16x32xf32>
    %28 = vector.broadcast %22 : vector<1x32xf32> to vector<16x32xf32>
    %29 = arith.mulf %28, %27 : vector<16x32xf32>
    %30 = vector.broadcast %23 : vector<1x32xf32> to vector<16x32xf32>
    %31 = arith.addf %29, %30 : vector<16x32xf32>
    %32 = arith.addf %0, %31 : vector<16x32xf32>
    %c0_11 = arith.constant 0 : index
    %c0_12 = arith.constant 0 : index
    %33 = vector.load %arg4[%c0_11, %c0_12] : memref<16x32xf32, #tpu.memory_space<vmem>>, vector<16x32xf32>
    tpu.vector_store %arg4[%c0_11, %c0_12], %32 {strides = array<i32>} : memref<16x32xf32, #tpu.memory_space<vmem>>, vector<16x32xf32>,
    return
  }
  func.func @transform_0(%arg0: i32) -> (i32, i32) {
    %c0_i32 = arith.constant 0 : i32
    %c0_i32_0 = arith.constant 0 : i32
    return %arg0, %c0_i32 : i32, i32
  }
  func.func @transform_1(%arg0: i32) -> (i32, i32) {
    %c0_i32 = arith.constant 0 : i32
    %c0_i32_0 = arith.constant 0 : i32
    %c0_i32_1 = arith.constant 0 : i32
    return %c0_i32, %c0_i32_0 : i32, i32
  }
  func.func @transform_2(%arg0: i32) -> (i32, i32) {
    %c0_i32 = arith.constant 0 : i32
    %c0_i32_0 = arith.constant 0 : i32
    %c0_i32_1 = arith.constant 0 : i32
    return %c0_i32, %c0_i32_0 : i32, i32
  }
  func.func @transform_3(%arg0: i32) -> (i32, i32) {
    %c0_i32 = arith.constant 0 : i32
    %c0_i32_0 = arith.constant 0 : i32
    return %arg0, %c0_i32 : i32, i32
  }
}

</mosaic_0001>

<llo_original>
// kernel: tpu_custom_call.1
$region0: #{tpu_custom_call.1}
  #allocation0 [shape = 'u32[]', space=smem, size = 0x4, offset = 0x4, fixed_abs, tag = 'smem constant byte address 0x4 - core index']
  #allocation1 [shape = 'u32[72,128]{1,0:T(1,128)}', space=vmem, size = 0x9000, scoped, tag = 'internal scratch']
  %s0 = inlined_call_operand.hbm [shape: f32[16,32], index: 0, kind: input, shape index: {}]
  %s1 = inlined_call_operand.hbm [shape: f32[1,32], index: 1, kind: input, shape index: {}]
  %s2 = inlined_call_operand.vmem [shape: f32[1,32], index: 2, kind: input, shape index: {}]
  %s3 = inlined_call_operand.hbm [shape: f32[16,32], index: 3, kind: output, shape index: {}]
  %s4 = sld [smem:[#allocation0]]
  $region30: #{tpu_custom_call.1} parent=0
    _
  %s6 = ssub.s32 1, %s4
  %s7 = scalar_select 0, %s6, %s4
  $region1: #{tpu_custom_call.1} parent=0
    #allocation2 [shape = 'u8[8192]{0}', space=vmem, size = 0x2000, scoped, tag = 'input window, operand 0, single buffered']
    #allocation3 [shape = 's32[1]{0}', space=sflag, size = 0x4, scoped, tag = 'scoped memory for tpu_custom_call.1']
    #allocation4 [shape = 's32[1]{0}', space=sflag, size = 0x4, scoped, tag = 'scoped memory for tpu_custom_call.1']
    #allocation5 [shape = 'u8[512]{0}', space=vmem, size = 0x400, scoped, tag = 'input window, operand 1, single buffered']
    #allocation6 [shape = 's32[1]{0}', space=sflag, size = 0x4, scoped, tag = 'scoped memory for tpu_custom_call.1']
    #allocation7 [shape = 'u8[8192]{0}', space=vmem, size = 0x2000, scoped, tag = 'output window, operand 0, single buffered']
    %8 = vsyncpa [#allocation3], 0
    %9 = vsyncpa [#allocation6], 0
    %10 = vsyncpa [#allocation4], 0
    // Predicated region
    $region2: #{tpu_custom_call.1} parent=1 // pred_check
      _
    $region3: #{tpu_custom_call.1} parent=1 // pred_check_branch
      %12 = sbr.rel (0) target = $region5
    $region4: #{tpu_custom_call.1} parent=1 // pred_region
      %14 = vsyncadd [#allocation3], 0
      %s15 = sshll.u32 %s0, 4
      %s16 = int_to_ptr.hbm [resolvable:$true] %s15
      %s17 = sshll.u32 [#allocation2], 4
      %s18 = int_to_ptr.vmem [resolvable:$true] %s17
      %23 = dma.hbm_to_vmem [thread:$0]  %s16, 256, %s18, [#allocation3], 128, 128, 8
    $region5: #{tpu_custom_call.1} parent=1 // pred_fallthru
      _
    // Predicated region
    $region6: #{tpu_custom_call.1} parent=1 // pred_check
      _
    $region7: #{tpu_custom_call.1} parent=1 // pred_check_branch
      %25 = sbr.rel (0) target = $region9
    $region8: #{tpu_custom_call.1} parent=1 // pred_region
      %27 = vsyncadd [#allocation6], 0
      %s29 = sshll.u32 %s1, 4
      %s30 = int_to_ptr.hbm [resolvable:$true] %s29
      %s31 = sshll.u32 [#allocation5], 4
      %s32 = int_to_ptr.vmem [resolvable:$true] %s31
      %34 = dma.hbm_to_vmem [thread:$0]  %s30, 16, %s32, [#allocation6]
    $region9: #{tpu_custom_call.1} parent=1 // pred_fallthru
      _
    // Predicated region
    $region10: #{tpu_custom_call.1} parent=1 // pred_check
      _
    $region11: #{tpu_custom_call.1} parent=1 // pred_check_branch
      %36 = sbr.rel (0) target = $region13
    $region12: #{tpu_custom_call.1} parent=1 // pred_region
      _
    $region13: #{tpu_custom_call.1} parent=1 // pred_fallthru
      _
    // Predicated region
    $region14: #{tpu_custom_call.1} parent=1 // pred_check
      _
    $region15: #{tpu_custom_call.1} parent=1 // pred_check_branch
      %38 = sbr.rel (0) target = $region17
    $region16: #{tpu_custom_call.1} parent=1 // pred_region
      %40 = dma.done [#allocation3], 256
    $region17: #{tpu_custom_call.1} parent=1 // pred_fallthru
      _
    // Predicated region
    $region18: #{tpu_custom_call.1} parent=1 // pred_check
      _
    $region19: #{tpu_custom_call.1} parent=1 // pred_check_branch
      %42 = sbr.rel (0) target = $region21
    $region20: #{tpu_custom_call.1} parent=1 // pred_region
      %44 = dma.done [#allocation6], 16
    $region21: #{tpu_custom_call.1} parent=1 // pred_fallthru
      _
    %v45 = vld [vmem:[#allocation2] sm:$0xff]
    %v46 = vld [vmem:[#allocation2 + $0x8] sm:$0xff]
    %vm47 = vcmask 261120
    %v48 = vsel %vm47, %v45, 0.0
    %49 = vadd.xlane.f32.xlu0 %v48
    %v50 = vpop.xlane.xlu0 %49
    %v51 = vsel %vm47, %v46, 0.0
    %52 = vadd.xlane.f32.xlu0 %v51
    %v53 = vpop.xlane.xlu0 %52
    %v54 = vmul.f32 %v45, %v45
    %v55 = vmul.f32 %v46, %v46
    %v56 = vsel %vm47, %v54, 0.0
    %57 = vadd.xlane.f32.xlu0 %v56
    %v58 = vpop.xlane.xlu0 %57
    %v59 = vsel %vm47, %v55, 0.0
    %60 = vadd.xlane.f32.xlu0 %v59
    %v61 = vpop.xlane.xlu0 %60
    %v62 = vmul.f32 %v50, 0.03125
    %v63 = vmul.f32 %v53, 0.03125
    %v64 = vmul.f32 %v50, %v62
    %v65 = vmul.f32 %v53, %v63
    %v66 = vsub.f32 %v58, %v64
    %v67 = vsub.f32 %v61, %v65
    %v68 = vmul.f32 %v66, 0.032258064
    %v69 = vmul.f32 %v67, 0.032258064
    %v70 = vmax.f32 %v68, 0.0
    %v71 = vmax.f32 %v69, 0.0
    %v72 = vrsqrt.pop %v70
    %v73 = vmul.f32 %v72, %v70
    %v74 = vmul.f32 %v73, %v72
    %v75 = vmul.f32 0.5, %v74
    %v76 = vsub.f32 1.5, %v75
    %v77 = vmul.f32 %v72, %v76
    %v78 = vmul.f32 %v70, %v77
    %vm79 = vcmp.eq.f32.partialorder %v70, inf
    %v80 = vsel %vm79, %v70, %v78
    %vm81 = vcmp.eq.f32.partialorder %v70, 0.0
    %v82 = vand.u32 %v70, 2147483648
    %v83 = vsel %vm81, %v82, %v80
    %v84 = vrsqrt.pop %v71
    %v85 = vmul.f32 %v84, %v71
    %v86 = vmul.f32 %v85, %v84
    %v87 = vmul.f32 0.5, %v86
    %v88 = vsub.f32 1.5, %v87
    %v89 = vmul.f32 %v84, %v88
    %v90 = vmul.f32 %v71, %v89
    %vm91 = vcmp.eq.f32.partialorder %v71, inf
    %v92 = vsel %vm91, %v71, %v90
    %vm93 = vcmp.eq.f32.partialorder %v71, 0.0
    %v94 = vand.u32 %v71, 2147483648
    %v95 = vsel %vm93, %v94, %v92
    %v96 = vadd.f32 %v83, 1e-06
    %v97 = vadd.f32 %v95, 1e-06
    %v98 = vrcp.pop %v96
    %v99 = vrcp.pop %v97
    %v100 = vmul.f32 %v96, %v98
    %v101 = vmul.f32 %v97, %v99
    %v102 = vsub.f32 2.0, %v100
    %v103 = vsub.f32 2.0, %v101
    %v104 = vmul.f32 %v98, %v102
    %v105 = vmul.f32 %v99, %v103
    %v106 = vld [vmem:[#allocation5] sm:$0x1]
    %v107 = vld [vmem:[%s2] sm:$0x1]
    %v108 = vsub.f32 %v45, %v62
    %v109 = vsub.f32 %v46, %v63
    %v110 = vmul.f32 %v108, %v104
    %v111 = vmul.f32 %v109, %v105
    %v113 = vperm.slane %v106, 0
    %v115 = vmul.f32 %v113, %v110
    %v116 = vmul.f32 %v113, %v111
    %v118 = vperm.slane %v107, 0
    %v120 = vadd.f32 %v115, %v118
    %v121 = vadd.f32 %v116, %v118
    %v122 = vadd.f32 %v45, %v120
    %v123 = vadd.f32 %v46, %v121
    %124 = vst.msk [vmem:[#allocation7] sm:$0xff] %vm47, %v122
    %125 = vst.msk [vmem:[#allocation7 + $0x8] sm:$0xff] %vm47, %v123
    // Predicated region
    $region22: #{tpu_custom_call.1} parent=1 // pred_check
      _
    $region23: #{tpu_custom_call.1} parent=1 // pred_check_branch
      %127 = sbr.rel (0) target = $region25
    $region24: #{tpu_custom_call.1} parent=1 // pred_region
      %129 = vsyncadd [#allocation4], 0
      %s130 = sshll.u32 [#allocation7], 4
      %s131 = int_to_ptr.vmem [resolvable:$true] %s130
      %s132 = sshll.u32 %s3, 4
      %s133 = int_to_ptr.hbm [resolvable:$true] %s132
      %138 = dma.vmem_to_hbm [thread:$0]  %s131, 256, %s133, [#allocation4], 128, 128, 8
    $region25: #{tpu_custom_call.1} parent=1 // pred_fallthru
      _
    // Predicated region
    $region26: #{tpu_custom_call.1} parent=1 // pred_check
      _
    $region27: #{tpu_custom_call.1} parent=1 // pred_check_branch
      %140 = sbr.rel (0) target = $region29
    $region28: #{tpu_custom_call.1} parent=1 // pred_region
      %142 = dma.done [#allocation4], 256
    $region29: #{tpu_custom_call.1} parent=1 // pred_fallthru
      _
    %143 = vsyncpa [#allocation3], 1
    %144 = vsyncpa [#allocation6], 1
    %145 = vsyncpa [#allocation4], 1

</llo_original>
